<compile_context>
chip_gen: v7x
topology: tpu7x:2x2x1
jax: 0.10.0
libtpu: 0.0.40
codegen_flags: <defaults>
</compile_context>

<pallas_src>
import numpy as np
import jax
import jax.numpy as jnp
from jax.experimental import pallas as pl
from jax.experimental.pallas import tpu as pltpu


def _round_up(v: int, m: int) -> int:
    return ((v + m - 1) // m) * m


def _vmem_capacity_bytes() -> int:
    try:
        return int(pltpu.get_tpu_info().vmem_capacity_bytes)
    except Exception:
        return 64 * 1024 * 1024  # conservative (v7x per-TensorCore)


def make_fourier_encoder(
    level: int,
    feat: int,
    block_n: int = 4096,
    dtype=jnp.float32,
    vmem_budget_bytes: int | None = None,
):
    """Builds a callable (N, F) -> (N, 2*level*F) Pallas kernel."""
    half = level * feat          # width of the sin (and cos) half
    out_f = 2 * half

    # scales = 2 ** arange(-level/2, level/2).  Per output column:
    #   multiplier = 1/scale (sin half then cos half, repeated per feature),
    #   phase      = 0 for the sin half, pi/2 for the cos half,
    # so the entire output is sin(x * mult + phase) in one pass.
    scales = (2.0 ** np.arange(-level / 2.0, level / 2.0)).astype(np.float32)
    inv_row = np.repeat((1.0 / scales).astype(np.float32), feat)           # (half,)
    mult_row = np.concatenate([inv_row, inv_row])                          # (out_f,)
    phase_row = np.concatenate([np.zeros(half, np.float32),
                                np.full(half, np.pi / 2.0, np.float32)])   # (out_f,)
    const = jnp.asarray(np.stack([mult_row, phase_row]).astype(np.float32))  # (2, out_f)

    def kernel(x_ref, const_ref, o_ref):
        x = x_ref[...].astype(jnp.float32)                        # (bn, F)
        # Single lane-dense replication of x across the full output width.
        # (Verify with pl.lower_as_mlir that this stays in-register lane shifts.)
        x_wide = jnp.concatenate([x] * (2 * level), axis=1)       # (bn, out_f)
        c = const_ref[...]                                        # (2, out_f)
        ms = x_wide * c[0:1, :] + c[1:2, :]                       # (bn, out_f)
        # One full-width, unmasked store (cos half via sin(x + pi/2)).
        o_ref[...] = jnp.sin(ms).astype(o_ref.dtype)

    def apply(x):
        n, f = x.shape
        assert f == feat, f"expected feature dim {feat}, got {f}"

        capacity = _vmem_capacity_bytes()
        budget = (vmem_budget_bytes if vmem_budget_bytes is not None
                  else max(8 << 20, capacity // 4))

        in_bytes = np.dtype(x.dtype).itemsize
        out_bytes = np.dtype(dtype).itemsize
        # Mosaic pads the minor dim to 128 lanes in VMEM -> budget padded bytes.
        padded_in = _round_up(feat, 128) * in_bytes
        padded_out_lanes = _round_up(out_f, 128)
        per_row = padded_in + padded_out_lanes * out_bytes

        # Largest row block whose double-buffered in+out tiles fit the budget...
        bn_cap = max(8, (budget // (2 * per_row)) // 8 * 8)
        bn = min(block_n, bn_cap)
        # ...but keep >= ~8 grid steps for DMA/compute overlap (and both v7x
        # TensorCores), with a 512-row floor so per-step overhead is amortized...
        bn = min(bn, max(512, _round_up(pl.cdiv(n, 8), 8)))
        # ...and never beyond the (sublane-padded) problem size.
        bn = max(8, min(bn, _round_up(n, 8)))
        bn = (bn // 8) * 8

        grid = (pl.cdiv(n, bn),)     # ragged last block: OOB rows masked by Pallas

        # Explicit VMEM limit: double-buffered x + out tiles, resident const,
        # f32 intermediates, plus a few MiB headroom; clamp below capacity.
        need = (2 * bn * padded_in
                + 2 * bn * padded_out_lanes * out_bytes
                + 2 * 8 * padded_out_lanes * 4
                + 2 * bn * padded_out_lanes * 4
                + (4 << 20))
        vmem_limit = int(min(max(need, 16 << 20), max(capacity - (2 << 20), 16 << 20)))

        return pl.pallas_call(
            kernel,
            out_shape=jax.ShapeDtypeStruct((n, out_f), dtype),
            grid_spec=pltpu.PrefetchScalarGridSpec(
                num_scalar_prefetch=0,
                grid=grid,
                in_specs=[
                    pl.BlockSpec((bn, feat), lambda i: (i, 0)),
                    # Same tiny block every step -> fetched once, stays resident.
                    pl.BlockSpec((2, out_f), lambda i: (0, 0)),
                ],
                out_specs=pl.BlockSpec((bn, out_f), lambda i: (i, 0)),
            ),
            compiler_params=pltpu.CompilerParams(
                dimension_semantics=("parallel",),
                vmem_limit_bytes=vmem_limit,
            ),
        )(x, const)

    return apply


def fourier_encoder_ref(x, level):
    """Pure-JAX reference matching the PyTorch forward."""
    scales = 2.0 ** jnp.arange(-level / 2.0, level / 2.0, dtype=x.dtype)
    ms = jnp.concatenate([x / s for s in scales], axis=1)
    return jnp.concatenate([jnp.sin(ms), jnp.cos(ms)], axis=1)


if __name__ == "__main__":
    level = 4      # scales = [0.25, 0.5, 1.0, 2.0] (even level -> exact reciprocals)
    N, F = 8, 16   # output (8, 2*4*16) = (8, 128): one full-width unmasked store

    x = jax.random.normal(jax.random.PRNGKey(0), (N, F), dtype=jnp.float32)

    encoder = make_fourier_encoder(level, F)
    out = jax.block_until_ready(encoder(x))

    ref = fourier_encoder_ref(x, level)
    assert out.shape == (N, 2 * level * F)
    # cos computed as sin(x + pi/2): ulp-level argument perturbation vs direct
    # cos, plus TPU polynomial sin/cos -> compare with tolerances.
    np.testing.assert_allclose(np.asarray(out), np.asarray(ref), rtol=1e-5, atol=1e-5)

    print("KERNEL_OK")
</pallas_src>

<mosaic_0001>
module attributes {stable_mosaic.version = 11 : i64} {
  func.func @kernel(%arg0: i32, %arg1: memref<8x16xf32, #tpu.memory_space<vmem>>, %arg2: memref<2x128xf32, #tpu.memory_space<vmem>>, %arg3: memref<8x128xf32, #tpu.memory_space<vmem>>) attributes {dimension_semantics = [#tpu.dimension_semantics<parallel>], iteration_bounds = array<i64: 1>, scalar_prefetch = 0 : i64, scratch_operands = 0 : i64, tpu.core_type = #tpu.core_type<tc>, window_params = [{transform_indices = @transform_0, window_bounds = array<i64: 8, 16>}, {pipeline_mode = #tpu.pipeline_mode<synchronous>, transform_indices = @transform_1, window_bounds = array<i64: 2, 128>}, {transform_indices = @transform_2, window_bounds = array<i64: 8, 128>}]} {
    %c0 = arith.constant 0 : index
    %c0_0 = arith.constant 0 : index
    %0 = vector.load %arg1[%c0, %c0_0] : memref<8x16xf32, #tpu.memory_space<vmem>>, vector<8x16xf32>
    %1 = tpu.concatenate %0, %0, %0, %0, %0, %0, %0, %0 in 1 : vector<8x16xf32>, vector<8x16xf32>, vector<8x16xf32>, vector<8x16xf32>, vector<8x16xf32>, vector<8x16xf32>, vector<8x16xf32>, vector<8x16xf32> -> vector<8x128xf32>
    %c0_1 = arith.constant 0 : index
    %c0_2 = arith.constant 0 : index
    %2 = vector.load %arg2[%c0_1, %c0_2] : memref<2x128xf32, #tpu.memory_space<vmem>>, vector<2x128xf32>
    %3 = vector.extract_strided_slice %2 {offsets = [0, 0], sizes = [1, 128], strides = [1, 1]} : vector<2x128xf32> to vector<1x128xf32>
    %4 = vector.broadcast %3 : vector<1x128xf32> to vector<8x128xf32>
    %5 = arith.mulf %1, %4 : vector<8x128xf32>
    %6 = vector.extract_strided_slice %2 {offsets = [1, 0], sizes = [1, 128], strides = [1, 1]} : vector<2x128xf32> to vector<1x128xf32>
    %7 = vector.broadcast %6 : vector<1x128xf32> to vector<8x128xf32>
    %8 = arith.addf %5, %7 : vector<8x128xf32>
    %9 = math.sin %8 : vector<8x128xf32>
    %c0_3 = arith.constant 0 : index
    %c0_4 = arith.constant 0 : index
    %10 = vector.load %arg3[%c0_3, %c0_4] : memref<8x128xf32, #tpu.memory_space<vmem>>, vector<8x128xf32>
    tpu.vector_store %arg3[%c0_3, %c0_4], %9 {strides = array<i32>} : memref<8x128xf32, #tpu.memory_space<vmem>>, vector<8x128xf32>,
    return
  }
  func.func @transform_0(%arg0: i32) -> (i32, i32) {
    %c0_i32 = arith.constant 0 : i32
    %c0_i32_0 = arith.constant 0 : i32
    return %arg0, %c0_i32 : i32, i32
  }
  func.func @transform_1(%arg0: i32) -> (i32, i32) {
    %c0_i32 = arith.constant 0 : i32
    %c0_i32_0 = arith.constant 0 : i32
    %c0_i32_1 = arith.constant 0 : i32
    return %c0_i32, %c0_i32_0 : i32, i32
  }
  func.func @transform_2(%arg0: i32) -> (i32, i32) {
    %c0_i32 = arith.constant 0 : i32
    %c0_i32_0 = arith.constant 0 : i32
    return %arg0, %c0_i32 : i32, i32
  }
}

</mosaic_0001>

<llo_original>
// kernel: tpu_custom_call.1
$region0: #{tpu_custom_call.1}
  #allocation0 [shape = 'u32[]', space=smem, size = 0x4, offset = 0x4, fixed_abs, tag = 'smem constant byte address 0x4 - core index']
  #allocation1 [shape = 'u32[144,128]{1,0:T(1,128)}', space=vmem, size = 0x12000, scoped, tag = 'internal scratch']
  %s0 = inlined_call_operand.hbm [shape: f32[8,16], index: 0, kind: input, shape index: {}]
  %s1 = inlined_call_operand.vmem [shape: f32[2,128], index: 1, kind: input, shape index: {}]
  %s2 = inlined_call_operand.hbm [shape: f32[8,128], index: 2, kind: output, shape index: {}]
  %s3 = sld [smem:[#allocation0]]
  $region22: #{tpu_custom_call.1} parent=0
    _
  %s5 = ssub.s32 1, %s3
  %s6 = scalar_select 0, %s5, %s3
  $region1: #{tpu_custom_call.1} parent=0
    #allocation2 [shape = 'u8[4096]{0}', space=vmem, size = 0x1000, scoped, tag = 'input window, operand 0, single buffered']
    #allocation3 [shape = 's32[1]{0}', space=sflag, size = 0x4, scoped, tag = 'scoped memory for tpu_custom_call.1']
    #allocation4 [shape = 's32[1]{0}', space=sflag, size = 0x4, scoped, tag = 'scoped memory for tpu_custom_call.1']
    #allocation5 [shape = 'u8[4096]{0}', space=vmem, size = 0x1000, scoped, tag = 'output window, operand 0, single buffered']
    %7 = vsyncpa [#allocation3], 0
    %8 = vsyncpa [#allocation4], 0
    // Predicated region
    $region2: #{tpu_custom_call.1} parent=1 // pred_check
      _
    $region3: #{tpu_custom_call.1} parent=1 // pred_check_branch
      %10 = sbr.rel (0) target = $region5
    $region4: #{tpu_custom_call.1} parent=1 // pred_region
      %s12 = ssub.s32 128, 128
      %13 = vsyncadd [#allocation3], %s12
      %s15 = sshll.u32 [#allocation2], 4
      %s16 = int_to_ptr.vmem [resolvable:$true] %s15
      %18 = dma.hbm_to_vmem [thread:$0]  %s0, 128, %s16, [#allocation3]
    $region5: #{tpu_custom_call.1} parent=1 // pred_fallthru
      _
    // Predicated region
    $region6: #{tpu_custom_call.1} parent=1 // pred_check
      _
    $region7: #{tpu_custom_call.1} parent=1 // pred_check_branch
      %20 = sbr.rel (0) target = $region9
    $region8: #{tpu_custom_call.1} parent=1 // pred_region
      _
    $region9: #{tpu_custom_call.1} parent=1 // pred_fallthru
      _
    // Predicated region
    $region10: #{tpu_custom_call.1} parent=1 // pred_check
      _
    $region11: #{tpu_custom_call.1} parent=1 // pred_check_branch
      %22 = sbr.rel (0) target = $region13
    $region12: #{tpu_custom_call.1} parent=1 // pred_region
      %23 = dma.done [#allocation3], 128
    $region13: #{tpu_custom_call.1} parent=1 // pred_fallthru
      _
    %v24 = vld [vmem:[#allocation2] sm:$0xff]
    %26 = vrot.lane.b32.xlu0 %v24, 16
    %v27 = vpop.permute.xlu0 %26
    %29 = vrot.lane.b32.xlu0 %v24, 32
    %v30 = vpop.permute.xlu0 %29
    %32 = vrot.lane.b32.xlu0 %v24, 48
    %v33 = vpop.permute.xlu0 %32
    %35 = vrot.lane.b32.xlu0 %v24, 64
    %v36 = vpop.permute.xlu0 %35
    %38 = vrot.lane.b32.xlu0 %v24, 80
    %v39 = vpop.permute.xlu0 %38
    %41 = vrot.lane.b32.xlu0 %v24, 96
    %v42 = vpop.permute.xlu0 %41
    %44 = vrot.lane.b32.xlu0 %v24, 112
    %v45 = vpop.permute.xlu0 %44
    %vm47 = vcmask 130048
    %v48 = vsel %vm47, %v24, %v27
    %vm49 = vcmask 261120
    %v50 = vsel %vm49, %v48, %v30
    %vm51 = vcmask 392192
    %v52 = vsel %vm51, %v50, %v33
    %vm53 = vcmask 523264
    %v54 = vsel %vm53, %v52, %v36
    %vm55 = vcmask 654336
    %v56 = vsel %vm55, %v54, %v39
    %vm57 = vcmask 785408
    %v58 = vsel %vm57, %v56, %v42
    %vm59 = vcmask 916480
    %v60 = vsel %vm59, %v58, %v45
    %v61 = vld [vmem:[%s1] sm:$0x3]
    %v62 = vlaneseq
    %v63 = vshrl.u32 %v62, 7
    %v64 = vsub.s32 0, %v63
    %v65 = vrot.slane %v61, %v64
    %v66 = vmul.f32 %v60, %v65
    %v67 = vlaneseq
    %v68 = vshrl.u32 %v67, 7
    %v69 = vsub.s32 1, %v68
    %v70 = vrot.slane %v61, %v69
    %v71 = vadd.f32 %v66, %v70
    %v72 = vand.u32 2147483647, %v71
    %vm73 = vcmp.le.f32.partialorder %v72, 0.7853982
    %vm74 = vcmp.lt.s32.totalorder %v71, 0
    %v75 = vand.u32 %v71, 2139095040
    %v76 = vshrl.u32 %v75, 23
    %v77 = vsub.s32 %v76, 127
    %v78 = vand.u32 2147483647, %v71
    %v79 = vand.u32 %v78, 8388607
    %v80 = vor.u32 %v79, 8388608
    %v81 = vsub.s32 0, %v80
    %v82 = vadd.s32 %v77, 1
    %vm83 = vcmp.gt.s32.totalorder %v82, 0
    %v84 = vsel %vm83, %v82, 0
    %v85 = vshrl.u32 %v84, 5
    %v86 = vand.u32 %v84, 31
    %v87 = vsub.s32 32, %v86
    %v88 = vshrl.u32 683565275, %v87
    %v89 = vshll.u32 683565275, %v86
    %v90 = vshrl.u32 2475754826, %v87
    %v91 = vor.u32 %v89, %v90
    %v92 = vshll.u32 2475754826, %v86
    %v93 = vshrl.u32 2131351028, %v87
    %v94 = vor.u32 %v92, %v93
    %v95 = vshll.u32 2131351028, %v86
    %v96 = vshrl.u32 2102212464, %v87
    %v97 = vor.u32 %v95, %v96
    %v98 = vshll.u32 2102212464, %v86
    %v99 = vshrl.u32 920167782, %v87
    %v100 = vor.u32 %v98, %v99
    %v101 = vshll.u32 920167782, %v86
    %v102 = vshrl.u32 1326507024, %v87
    %v103 = vor.u32 %v101, %v102
    %vm104 = vcmp.lt.s32.totalorder %v85, 1
    %vm105 = vcmp.lt.s32.totalorder %v85, 2
    %vm106 = vcmp.lt.s32.totalorder %v85, 3
    %vm107 = vcmp.lt.s32.totalorder %v85, 4
    %v108 = vsel %vm104, %v88, %v91
    %v109 = vsel %vm107, %v97, 2102212464
    %v110 = vsel %vm106, %v94, %v109
    %v111 = vsel %vm105, %v108, %v110
    %v112 = vsel %vm104, %v91, %v94
    %v113 = vsel %vm107, %v100, 920167782
    %v114 = vsel %vm106, %v97, %v113
    %v115 = vsel %vm105, %v112, %v114
    %v116 = vsel %vm104, %v94, %v97
    %v117 = vsel %vm107, %v103, 1326507024
    %v118 = vsel %vm106, %v100, %v117
    %v119 = vsel %vm105, %v116, %v118
    %v120 = vshll.u32 %v80, 8
    %v121 = vmul.u32.u64.compose %v120, %v119
    %v122 = vextract.low.u32 %v121
    %v123 = vextract.high.u32 %v121
    %v124 = vmul.u32.u64.compose %v120, %v115
    %v125 = vextract.low.u32 %v124
    %v126 = vextract.high.u32 %v124
    %v127 = vmul.u32 %v120, %v111
    %v128 = vadd.s32 %v123, %v125
    %vm129 = vc.u32 %v123, %v125
    %v130 = vadd.s32 %v126, 1
    %v131 = vsel %vm129, %v130, %v126
    %v132 = vadd.s32 %v127, %v131
    %v133 = vadd.s32 %v132, 536870912
    %v134 = vshrl.u32 %v133, 30
    %v135 = vshll.u32 %v134, 30
    %v136 = vsub.s32 %v132, %v135
    %vm137 = vcmp.lt.s32.totalorder %v136, 0
    %v138 = vsub.s32 0, %v136
    %v139 = vsel %vm137, %v138, %v136
    %v140 = vclz %v139
    %v141 = vsub.s32 %v140, 2
    %vm142 = vcmp.gt.s32.totalorder 0, %v141
    %v143 = vsel %vm142, 0, %v141
    %v144 = vsub.s32 32, %v143
    %v145 = vshll.u32 %v136, %v143
    %v146 = vshrl.u32 %v128, %v144
    %v147 = vor.u32 %v145, %v146
    %v148 = vsub.s32 4294967266, %v143
    %v149 = vadd.s32 %v148, 127
    %v150 = vshll.u32 %v149, 23
    %v151 = vor.u32 4788187, %v150
    %v152 = vand.u32 2147483647, %v151
    %v154 = vcvt.s32.f32 %v147
    %v155 = vmul.f32 %v154, %v152
    %v156 = vxor.u32 %v155, 2147483648
    %v157 = vsel %vm74, %v156, %v155
    %v158 = vsub.s32 4, %v134
    %v159 = vsel %vm74, %v158, %v134
    %v160 = vsel %vm73, %v71, %v157
    %v161 = vsel %vm73, 0, %v159
    %v162 = vcosq.f32.pop %v160
    %v163 = vsinq.f32.pop %v160
    %vm164 = vweird.f32 %v71
    %v165 = vadd.s32 %v161, 3
    %v166 = vand.u32 %v165, 3
    %vm167 = vcmp.lt.s32.totalorder %v166, 2
    %vm168 = vcmp.eq.s32.totalorder %v166, 0
    %v169 = vxor.u32 %v163, 2147483648
    %v170 = vsel %vm168, %v162, %v169
    %vm171 = vcmp.eq.s32.totalorder %v166, 2
    %v172 = vxor.u32 %v162, 2147483648
    %v173 = vsel %vm171, %v172, %v163
    %v174 = vsel %vm167, %v170, %v173
    %v175 = vsel %vm164, nan, %v174
    %176 = vst [vmem:[#allocation5] sm:$0xff] %v175
    // Predicated region
    $region14: #{tpu_custom_call.1} parent=1 // pred_check
      _
    $region15: #{tpu_custom_call.1} parent=1 // pred_check_branch
      %178 = sbr.rel (0) target = $region17
    $region16: #{tpu_custom_call.1} parent=1 // pred_region
      %s180 = ssub.s32 128, 128
      %181 = vsyncadd [#allocation4], %s180
      %s183 = sshll.u32 [#allocation5], 4
      %s184 = int_to_ptr.vmem [resolvable:$true] %s183
      %186 = dma.vmem_to_hbm [thread:$0]  %s184, 128, %s2, [#allocation4]
    $region17: #{tpu_custom_call.1} parent=1 // pred_fallthru
      _
    // Predicated region
    $region18: #{tpu_custom_call.1} parent=1 // pred_check
      _
    $region19: #{tpu_custom_call.1} parent=1 // pred_check_branch
      %188 = sbr.rel (0) target = $region21
    $region20: #{tpu_custom_call.1} parent=1 // pred_region
      %189 = dma.done [#allocation4], 128
    $region21: #{tpu_custom_call.1} parent=1 // pred_fallthru
      _
    %190 = vsyncpa [#allocation3], 1
    %191 = vsyncpa [#allocation4], 1

</llo_original>
